<compile_context>
chip_gen: v7x
topology: tpu7x:2x2x1
jax: 0.10.0
libtpu: 0.0.40
codegen_flags: <defaults>
</compile_context>

<pallas_src>
import jax
import jax.numpy as jnp
from jax.experimental import pallas as pl
from jax.experimental.pallas import tpu as pltpu


def vae_kernel(
    x_ref, eps_ref,
    w1_ref, b1_ref,
    w2x_ref, b2x_ref,
    w3_ref, b3_ref,
    w4_ref, b4_ref,
    recon_ref, heads_ref,
):
    z_dim = eps_ref.shape[-1]

    # ---- encode: fc1 + relu (bf16 MXU operands, f32 accumulation) ----
    h1 = jnp.dot(x_ref[...], w1_ref[...], preferred_element_type=jnp.float32)
    h1 = jnp.maximum(h1 + b1_ref[...], 0.0)

    # ---- fused fc21 || fc22 head: single MXU pass -> packed [mu | logvar] ----
    heads = jnp.dot(h1.astype(jnp.bfloat16), w2x_ref[...],
                    preferred_element_type=jnp.float32) + b2x_ref[...]
    heads_ref[...] = heads                       # lane-dense (TB, 2*z_dim) store

    mu = heads[:, :z_dim]
    logvar = heads[:, z_dim:]

    # ---- reparameterize (f32 elementwise; exp on the EUP slot) ----
    std = jnp.exp(0.5 * logvar)
    z = mu + eps_ref[...] * std

    # ---- decode: fc3 + relu ----
    h3 = jnp.dot(z.astype(jnp.bfloat16), w3_ref[...],
                 preferred_element_type=jnp.float32)
    h3 = jnp.maximum(h3 + b3_ref[...], 0.0)

    # ---- fc4 + sigmoid (divide moved to EUP via approx reciprocal) ----
    logits = jnp.dot(h3.astype(jnp.bfloat16), w4_ref[...],
                     preferred_element_type=jnp.float32) + b4_ref[...]
    # exp(-logits) may hit inf for very negative logits; reciprocal of inf -> 0,
    # which matches the reference sigmoid within tolerance.
    recon_ref[...] = pl.reciprocal(1.0 + jnp.exp(-logits), approx=True)


def vae_forward(x, eps, params, *, batch_tile=128):
    """Fused VAE forward. Returns (recon, mu, logvar)."""
    input_dim, hidden_dim = params["w1"].shape
    z_dim = params["w2x"].shape[1] // 2

    # PyTorch reference does x.view(-1, len(x)); only well-formed when
    # batch == input_dim (identity reshape of a square batch).
    assert x.shape[0] == input_dim, "x.view(-1, len(x)) requires batch == input_dim"
    x2 = x.reshape(-1, x.shape[0]).astype(jnp.bfloat16)
    B = x2.shape[0]
    assert eps.shape == (B, z_dim)

    tb = min(batch_tile, B)
    assert B % tb == 0
    grid = (B // tb,)

    def row_spec(cols):                      # tiled over the batch grid axis
        return pl.BlockSpec((tb, cols), lambda i: (i, 0))

    def full_spec(shape):                    # resident weights / biases
        return pl.BlockSpec(shape, lambda i: (0, 0))

    recon, heads = pl.pallas_call(
        vae_kernel,
        out_shape=(
            jax.ShapeDtypeStruct((B, input_dim), jnp.float32),
            jax.ShapeDtypeStruct((B, 2 * z_dim), jnp.float32),
        ),
        grid=grid,
        in_specs=[
            row_spec(input_dim),                        # x
            row_spec(z_dim),                            # eps
            full_spec((input_dim, hidden_dim)),         # w1
            full_spec((1, hidden_dim)),                 # b1
            full_spec((hidden_dim, 2 * z_dim)),         # w2x = [w21 | w22]
            full_spec((1, 2 * z_dim)),                  # b2x = [b21 | b22]
            full_spec((z_dim, hidden_dim)),             # w3
            full_spec((1, hidden_dim)),                 # b3
            full_spec((hidden_dim, input_dim)),         # w4
            full_spec((1, input_dim)),                  # b4
        ],
        out_specs=(row_spec(input_dim), row_spec(2 * z_dim)),
        compiler_params=pltpu.CompilerParams(
            dimension_semantics=("parallel",)),         # shards over v7x's 2 TCs
    )(x2, eps,
      params["w1"], params["b1"],
      params["w2x"], params["b2x"],
      params["w3"], params["b3"],
      params["w4"], params["b4"])

    mu = heads[:, :z_dim]
    logvar = heads[:, z_dim:]
    return recon, mu, logvar


def init_params(key, input_dim, hidden_dim, z_dim):
    """Deterministic init. Weights (in, out) bf16, biases (1, out) f32."""
    ks = jax.random.split(key, 10)

    def linear(kw, kb, fan_in, fan_out):
        bound = 1.0 / jnp.sqrt(float(fan_in))
        w = jax.random.uniform(kw, (fan_in, fan_out), jnp.float32, -bound, bound)
        b = jax.random.uniform(kb, (1, fan_out), jnp.float32, -bound, bound)
        return w.astype(jnp.bfloat16), b

    w1, b1 = linear(ks[0], ks[1], input_dim, hidden_dim)
    w21, b21 = linear(ks[2], ks[3], hidden_dim, z_dim)
    w22, b22 = linear(ks[4], ks[5], hidden_dim, z_dim)
    w3, b3 = linear(ks[6], ks[7], z_dim, hidden_dim)
    w4, b4 = linear(ks[8], ks[9], hidden_dim, input_dim)
    # Fuse the two heads into a single weight/bias (one MXU pass in-kernel).
    w2x = jnp.concatenate([w21, w22], axis=1)
    b2x = jnp.concatenate([b21, b22], axis=1)
    return dict(w1=w1, b1=b1, w2x=w2x, b2x=b2x, w3=w3, b3=b3, w4=w4, b4=b4)


def vae_forward_ref(x, eps, params):
    """Pure-JAX reference mirroring the kernel math (bf16 operands, f32 acc)."""
    z_dim = eps.shape[-1]
    f32 = jnp.float32
    x2 = x.reshape(-1, x.shape[0]).astype(jnp.bfloat16)
    h1 = jnp.maximum(
        jnp.dot(x2, params["w1"], preferred_element_type=f32) + params["b1"], 0.0)
    heads = jnp.dot(h1.astype(jnp.bfloat16), params["w2x"],
                    preferred_element_type=f32) + params["b2x"]
    mu, logvar = heads[:, :z_dim], heads[:, z_dim:]
    std = jnp.exp(0.5 * logvar)
    z = mu + eps * std
    h3 = jnp.maximum(
        jnp.dot(z.astype(jnp.bfloat16), params["w3"],
                preferred_element_type=f32) + params["b3"], 0.0)
    logits = jnp.dot(h3.astype(jnp.bfloat16), params["w4"],
                     preferred_element_type=f32) + params["b4"]
    return jax.nn.sigmoid(logits), mu, logvar


if __name__ == "__main__":
    # MXU/sublane-friendly demo shapes (batch must equal input_dim, see above).
    input_dim, hidden_dim, z_dim = 128, 256, 64
    batch = input_dim

    key = jax.random.PRNGKey(0)
    k_x, k_eps, k_params = jax.random.split(key, 3)

    x = jax.random.normal(k_x, (batch, input_dim), jnp.float32)
    eps = jax.random.normal(k_eps, (batch, z_dim), jnp.float32)  # torch.randn_like(std)
    params = init_params(k_params, input_dim, hidden_dim, z_dim)

    recon, mu, logvar = vae_forward(x, eps, params)
    jax.block_until_ready((recon, mu, logvar))

    # Correctness check against the pure-JAX reference (tolerance covers the
    # approx-reciprocal sigmoid and bf16 rounding differences).
    recon_r, mu_r, logvar_r = vae_forward_ref(x, eps, params)
    assert recon.shape == (batch, input_dim)
    assert mu.shape == (batch, z_dim) and logvar.shape == (batch, z_dim)
    assert jnp.allclose(recon, recon_r, atol=1e-2, rtol=1e-2)
    assert jnp.allclose(mu, mu_r, atol=1e-2, rtol=1e-2)
    assert jnp.allclose(logvar, logvar_r, atol=1e-2, rtol=1e-2)

    print("KERNEL_OK")
</pallas_src>

<mosaic_0001>
module attributes {stable_mosaic.version = 11 : i64} {
  func.func @vae_kernel(%arg0: i32, %arg1: memref<128x128xbf16, #tpu.memory_space<vmem>>, %arg2: memref<128x64xf32, #tpu.memory_space<vmem>>, %arg3: memref<128x256xbf16, #tpu.memory_space<vmem>>, %arg4: memref<1x256xf32, #tpu.memory_space<vmem>>, %arg5: memref<256x128xbf16, #tpu.memory_space<vmem>>, %arg6: memref<1x128xf32, #tpu.memory_space<vmem>>, %arg7: memref<64x256xbf16, #tpu.memory_space<vmem>>, %arg8: memref<1x256xf32, #tpu.memory_space<vmem>>, %arg9: memref<256x128xbf16, #tpu.memory_space<vmem>>, %arg10: memref<1x128xf32, #tpu.memory_space<vmem>>, %arg11: memref<128x128xf32, #tpu.memory_space<vmem>>, %arg12: memref<128x128xf32, #tpu.memory_space<vmem>>) attributes {dimension_semantics = [#tpu.dimension_semantics<parallel>], iteration_bounds = array<i64: 1>, scalar_prefetch = 0 : i64, scratch_operands = 0 : i64, tpu.core_type = #tpu.core_type<tc>, window_params = [{transform_indices = @transform_0, window_bounds = array<i64: 128, 128>}, {transform_indices = @transform_1, window_bounds = array<i64: 128, 64>}, {pipeline_mode = #tpu.pipeline_mode<synchronous>, transform_indices = @transform_2, window_bounds = array<i64: 128, 256>}, {pipeline_mode = #tpu.pipeline_mode<synchronous>, transform_indices = @transform_3, window_bounds = array<i64: 1, 256>}, {pipeline_mode = #tpu.pipeline_mode<synchronous>, transform_indices = @transform_4, window_bounds = array<i64: 256, 128>}, {pipeline_mode = #tpu.pipeline_mode<synchronous>, transform_indices = @transform_5, window_bounds = array<i64: 1, 128>}, {pipeline_mode = #tpu.pipeline_mode<synchronous>, transform_indices = @transform_6, window_bounds = array<i64: 64, 256>}, {pipeline_mode = #tpu.pipeline_mode<synchronous>, transform_indices = @transform_7, window_bounds = array<i64: 1, 256>}, {pipeline_mode = #tpu.pipeline_mode<synchronous>, transform_indices = @transform_8, window_bounds = array<i64: 256, 128>}, {pipeline_mode = #tpu.pipeline_mode<synchronous>, transform_indices = @transform_9, window_bounds = array<i64: 1, 128>}, {transform_indices = @transform_10, window_bounds = array<i64: 128, 128>}, {transform_indices = @transform_11, window_bounds = array<i64: 128, 128>}]} {
    %c0 = arith.constant 0 : index
    %c0_0 = arith.constant 0 : index
    %0 = vector.load %arg1[%c0, %c0_0] : memref<128x128xbf16, #tpu.memory_space<vmem>>, vector<128x128xbf16>
    %c0_1 = arith.constant 0 : index
    %c0_2 = arith.constant 0 : index
    %1 = vector.load %arg3[%c0_1, %c0_2] : memref<128x256xbf16, #tpu.memory_space<vmem>>, vector<128x256xbf16>
    %cst = arith.constant dense<0.000000e+00> : vector<128x256xf32>
    %2 = tpu.matmul %0, %1, %cst {dimension_numbers = #tpu.dot_dimension_numbers<[1], [0], [0], [1], [0, 0, 1, 1], [], []>} : vector<128x128xbf16>, vector<128x256xbf16>, vector<128x256xf32> -> vector<128x256xf32>
    %c0_3 = arith.constant 0 : index
    %c0_4 = arith.constant 0 : index
    %3 = vector.load %arg4[%c0_3, %c0_4] : memref<1x256xf32, #tpu.memory_space<vmem>>, vector<1x256xf32>
    %4 = vector.broadcast %3 : vector<1x256xf32> to vector<128x256xf32>
    %5 = arith.addf %2, %4 : vector<128x256xf32>
    %cst_5 = arith.constant 0.000000e+00 : f32
    %6 = vector.broadcast %cst_5 : f32 to vector<128x256xf32>
    %7 = arith.maximumf %5, %6 : vector<128x256xf32>
    %8 = arith.truncf %7 : vector<128x256xf32> to vector<128x256xbf16>
    %c0_6 = arith.constant 0 : index
    %c0_7 = arith.constant 0 : index
    %9 = vector.load %arg5[%c0_6, %c0_7] : memref<256x128xbf16, #tpu.memory_space<vmem>>, vector<256x128xbf16>
    %cst_8 = arith.constant dense<0.000000e+00> : vector<128x128xf32>
    %10 = tpu.matmul %8, %9, %cst_8 {dimension_numbers = #tpu.dot_dimension_numbers<[1], [0], [0], [1], [0, 0, 1, 1], [], []>} : vector<128x256xbf16>, vector<256x128xbf16>, vector<128x128xf32> -> vector<128x128xf32>
    %c0_9 = arith.constant 0 : index
    %c0_10 = arith.constant 0 : index
    %11 = vector.load %arg6[%c0_9, %c0_10] : memref<1x128xf32, #tpu.memory_space<vmem>>, vector<1x128xf32>
    %12 = vector.broadcast %11 : vector<1x128xf32> to vector<128x128xf32>
    %13 = arith.addf %10, %12 : vector<128x128xf32>
    %c0_11 = arith.constant 0 : index
    %c0_12 = arith.constant 0 : index
    %14 = vector.load %arg12[%c0_11, %c0_12] : memref<128x128xf32, #tpu.memory_space<vmem>>, vector<128x128xf32>
    tpu.vector_store %arg12[%c0_11, %c0_12], %13 {strides = array<i32>} : memref<128x128xf32, #tpu.memory_space<vmem>>, vector<128x128xf32>,
    %15 = vector.extract_strided_slice %13 {offsets = [0, 0], sizes = [128, 64], strides = [1, 1]} : vector<128x128xf32> to vector<128x64xf32>
    %16 = vector.extract_strided_slice %13 {offsets = [0, 64], sizes = [128, 64], strides = [1, 1]} : vector<128x128xf32> to vector<128x64xf32>
    %cst_13 = arith.constant 5.000000e-01 : f32
    %17 = vector.broadcast %cst_13 : f32 to vector<128x64xf32>
    %18 = arith.mulf %17, %16 : vector<128x64xf32>
    %19 = math.exp %18 : vector<128x64xf32>
    %c0_14 = arith.constant 0 : index
    %c0_15 = arith.constant 0 : index
    %20 = vector.load %arg2[%c0_14, %c0_15] : memref<128x64xf32, #tpu.memory_space<vmem>>, vector<128x64xf32>
    %21 = arith.mulf %20, %19 : vector<128x64xf32>
    %22 = arith.addf %15, %21 : vector<128x64xf32>
    %23 = arith.truncf %22 : vector<128x64xf32> to vector<128x64xbf16>
    %c0_16 = arith.constant 0 : index
    %c0_17 = arith.constant 0 : index
    %24 = vector.load %arg7[%c0_16, %c0_17] : memref<64x256xbf16, #tpu.memory_space<vmem>>, vector<64x256xbf16>
    %cst_18 = arith.constant dense<0.000000e+00> : vector<128x256xf32>
    %25 = tpu.matmul %23, %24, %cst_18 {dimension_numbers = #tpu.dot_dimension_numbers<[1], [0], [0], [1], [0, 0, 1, 1], [], []>} : vector<128x64xbf16>, vector<64x256xbf16>, vector<128x256xf32> -> vector<128x256xf32>
    %c0_19 = arith.constant 0 : index
    %c0_20 = arith.constant 0 : index
    %26 = vector.load %arg8[%c0_19, %c0_20] : memref<1x256xf32, #tpu.memory_space<vmem>>, vector<1x256xf32>
    %27 = vector.broadcast %26 : vector<1x256xf32> to vector<128x256xf32>
    %28 = arith.addf %25, %27 : vector<128x256xf32>
    %cst_21 = arith.constant 0.000000e+00 : f32
    %29 = vector.broadcast %cst_21 : f32 to vector<128x256xf32>
    %30 = arith.maximumf %28, %29 : vector<128x256xf32>
    %31 = arith.truncf %30 : vector<128x256xf32> to vector<128x256xbf16>
    %c0_22 = arith.constant 0 : index
    %c0_23 = arith.constant 0 : index
    %32 = vector.load %arg9[%c0_22, %c0_23] : memref<256x128xbf16, #tpu.memory_space<vmem>>, vector<256x128xbf16>
    %cst_24 = arith.constant dense<0.000000e+00> : vector<128x128xf32>
    %33 = tpu.matmul %31, %32, %cst_24 {dimension_numbers = #tpu.dot_dimension_numbers<[1], [0], [0], [1], [0, 0, 1, 1], [], []>} : vector<128x256xbf16>, vector<256x128xbf16>, vector<128x128xf32> -> vector<128x128xf32>
    %c0_25 = arith.constant 0 : index
    %c0_26 = arith.constant 0 : index
    %34 = vector.load %arg10[%c0_25, %c0_26] : memref<1x128xf32, #tpu.memory_space<vmem>>, vector<1x128xf32>
    %35 = vector.broadcast %34 : vector<1x128xf32> to vector<128x128xf32>
    %36 = arith.addf %33, %35 : vector<128x128xf32>
    %cst_27 = arith.constant 0.000000e+00 : f32
    %37 = vector.broadcast %cst_27 : f32 to vector<128x128xf32>
    %38 = arith.subf %37, %36 : vector<128x128xf32>
    %39 = math.exp %38 : vector<128x128xf32>
    %cst_28 = arith.constant 1.000000e+00 : f32
    %40 = vector.broadcast %cst_28 : f32 to vector<128x128xf32>
    %41 = arith.addf %40, %39 : vector<128x128xf32>
    %42 = tpu.reciprocal %41 {approx = true} : vector<128x128xf32> -> vector<128x128xf32>
    %c0_29 = arith.constant 0 : index
    %c0_30 = arith.constant 0 : index
    %43 = vector.load %arg11[%c0_29, %c0_30] : memref<128x128xf32, #tpu.memory_space<vmem>>, vector<128x128xf32>
    tpu.vector_store %arg11[%c0_29, %c0_30], %42 {strides = array<i32>} : memref<128x128xf32, #tpu.memory_space<vmem>>, vector<128x128xf32>,
    return
  }
  func.func @transform_0(%arg0: i32) -> (i32, i32) {
    %c0_i32 = arith.constant 0 : i32
    %c0_i32_0 = arith.constant 0 : i32
    return %arg0, %c0_i32 : i32, i32
  }
  func.func @transform_1(%arg0: i32) -> (i32, i32) {
    %c0_i32 = arith.constant 0 : i32
    %c0_i32_0 = arith.constant 0 : i32
    return %arg0, %c0_i32 : i32, i32
  }
  func.func @transform_2(%arg0: i32) -> (i32, i32) {
    %c0_i32 = arith.constant 0 : i32
    %c0_i32_0 = arith.constant 0 : i32
    %c0_i32_1 = arith.constant 0 : i32
    return %c0_i32, %c0_i32_0 : i32, i32
  }
  func.func @transform_3(%arg0: i32) -> (i32, i32) {
    %c0_i32 = arith.constant 0 : i32
    %c0_i32_0 = arith.constant 0 : i32
    %c0_i32_1 = arith.constant 0 : i32
    return %c0_i32, %c0_i32_0 : i32, i32
  }
  func.func @transform_4(%arg0: i32) -> (i32, i32) {
    %c0_i32 = arith.constant 0 : i32
    %c0_i32_0 = arith.constant 0 : i32
    %c0_i32_1 = arith.constant 0 : i32
    return %c0_i32, %c0_i32_0 : i32, i32
  }
  func.func @transform_5(%arg0: i32) -> (i32, i32) {
    %c0_i32 = arith.constant 0 : i32
    %c0_i32_0 = arith.constant 0 : i32
    %c0_i32_1 = arith.constant 0 : i32
    return %c0_i32, %c0_i32_0 : i32, i32
  }
  func.func @transform_6(%arg0: i32) -> (i32, i32) {
    %c0_i32 = arith.constant 0 : i32
    %c0_i32_0 = arith.constant 0 : i32
    %c0_i32_1 = arith.constant 0 : i32
    return %c0_i32, %c0_i32_0 : i32, i32
  }
  func.func @transform_7(%arg0: i32) -> (i32, i32) {
    %c0_i32 = arith.constant 0 : i32
    %c0_i32_0 = arith.constant 0 : i32
    %c0_i32_1 = arith.constant 0 : i32
    return %c0_i32, %c0_i32_0 : i32, i32
  }
  func.func @transform_8(%arg0: i32) -> (i32, i32) {
    %c0_i32 = arith.constant 0 : i32
    %c0_i32_0 = arith.constant 0 : i32
    %c0_i32_1 = arith.constant 0 : i32
    return %c0_i32, %c0_i32_0 : i32, i32
  }
  func.func @transform_9(%arg0: i32) -> (i32, i32) {
    %c0_i32 = arith.constant 0 : i32
    %c0_i32_0 = arith.constant 0 : i32
    %c0_i32_1 = arith.constant 0 : i32
    return %c0_i32, %c0_i32_0 : i32, i32
  }
  func.func @transform_10(%arg0: i32) -> (i32, i32) {
    %c0_i32 = arith.constant 0 : i32
    %c0_i32_0 = arith.constant 0 : i32
    return %arg0, %c0_i32 : i32, i32
  }
  func.func @transform_11(%arg0: i32) -> (i32, i32) {
    %c0_i32 = arith.constant 0 : i32
    %c0_i32_0 = arith.constant 0 : i32
    return %arg0, %c0_i32 : i32, i32
  }
}

</mosaic_0001>

<llo_original>
// kernel: tpu_custom_call.1
$region0: #{tpu_custom_call.1}
  #allocation0 [shape = 'u32[]', space=smem, size = 0x4, offset = 0x4, fixed_abs, tag = 'smem constant byte address 0x4 - core index']
  #allocation1 [shape = 'u32[144,128]{1,0:T(1,128)}', space=vmem, size = 0x12000, scoped, tag = 'internal scratch']
  %s0 = inlined_call_operand.vmem [shape: bf16[128,128], index: 0, kind: input, shape index: {}]
  %s1 = inlined_call_operand.vmem [shape: f32[128,64], index: 1, kind: input, shape index: {}]
  %s2 = inlined_call_operand.vmem [shape: bf16[128,256], index: 2, kind: input, shape index: {}]
  %s3 = inlined_call_operand.vmem [shape: f32[1,256], index: 3, kind: input, shape index: {}]
  %s4 = inlined_call_operand.hbm [shape: bf16[256,128], index: 4, kind: input, shape index: {}]
  %s5 = inlined_call_operand.vmem [shape: f32[1,128], index: 5, kind: input, shape index: {}]
  %s6 = inlined_call_operand.hbm [shape: bf16[64,256], index: 6, kind: input, shape index: {}]
  %s7 = inlined_call_operand.vmem [shape: f32[1,256], index: 7, kind: input, shape index: {}]
  %s8 = inlined_call_operand.hbm [shape: bf16[256,128], index: 8, kind: input, shape index: {}]
  %s9 = inlined_call_operand.vmem [shape: f32[1,128], index: 9, kind: input, shape index: {}]
  %s10 = inlined_call_operand.hbm [shape: f32[128,128], index: 10, kind: output, shape index: {0}]
  %s11 = inlined_call_operand.hbm [shape: f32[128,128], index: 11, kind: output, shape index: {1}]
  %12 = xla_tuple %s10, %s11
  %s13 = sld [smem:[#allocation0]]
  $region70: #{tpu_custom_call.1} parent=0
    _
  %s15 = ssub.s32 1, %s13
  %s16 = scalar_select 0, %s15, %s13
  $region1: #{tpu_custom_call.1} parent=0
    #allocation2 [shape = 'u8[65536]{0}', space=vmem, size = 0x10000, scoped, tag = 'input window, operand 4, single buffered']
    #allocation3 [shape = 's32[1]{0}', space=sflag, size = 0x4, scoped, tag = 'scoped memory for tpu_custom_call.1']
    #allocation4 [shape = 's32[1]{0}', space=sflag, size = 0x4, scoped, tag = 'scoped memory for tpu_custom_call.1']
    #allocation5 [shape = 'u8[32768]{0}', space=vmem, size = 0x8000, scoped, tag = 'input window, operand 6, single buffered']
    #allocation6 [shape = 's32[1]{0}', space=sflag, size = 0x4, scoped, tag = 'scoped memory for tpu_custom_call.1']
    #allocation7 [shape = 'u8[65536]{0}', space=vmem, size = 0x10000, scoped, tag = 'input window, operand 8, single buffered']
    #allocation8 [shape = 'u8[65536]{0}', space=vmem, size = 0x10000, scoped, tag = 'output window, operand 0, single buffered']
    #allocation9 [shape = 'u8[65536]{0}', space=vmem, size = 0x10000, scoped, tag = 'output window, operand 1, single buffered']
    #allocation10 [shape = 's32[1]{0}', space=sflag, size = 0x4, scoped, tag = 'scoped memory for tpu_custom_call.1']
    %17 = vsyncpa [#allocation3], 0
    %18 = vsyncpa [#allocation6], 0
    %19 = vsyncpa [#allocation4], 0
    %20 = vsyncpa [#allocation10], 0
    // Predicated region
    $region2: #{tpu_custom_call.1} parent=1 // pred_check
      _
    $region3: #{tpu_custom_call.1} parent=1 // pred_check_branch
      %22 = sbr.rel (0) target = $region5
    $region4: #{tpu_custom_call.1} parent=1 // pred_region
      _
    $region5: #{tpu_custom_call.1} parent=1 // pred_fallthru
      _
    // Predicated region
    $region6: #{tpu_custom_call.1} parent=1 // pred_check
      _
    $region7: #{tpu_custom_call.1} parent=1 // pred_check_branch
      %24 = sbr.rel (0) target = $region9
    $region8: #{tpu_custom_call.1} parent=1 // pred_region
      _
    $region9: #{tpu_custom_call.1} parent=1 // pred_fallthru
      _
    // Predicated region
    $region10: #{tpu_custom_call.1} parent=1 // pred_check
      _
    $region11: #{tpu_custom_call.1} parent=1 // pred_check_branch
      %26 = sbr.rel (0) target = $region13
    $region12: #{tpu_custom_call.1} parent=1 // pred_region
      _
    $region13: #{tpu_custom_call.1} parent=1 // pred_fallthru
      _
    // Predicated region
    $region14: #{tpu_custom_call.1} parent=1 // pred_check
      _
    $region15: #{tpu_custom_call.1} parent=1 // pred_check_branch
      %28 = sbr.rel (0) target = $region17
    $region16: #{tpu_custom_call.1} parent=1 // pred_region
      _
    $region17: #{tpu_custom_call.1} parent=1 // pred_fallthru
      _
    // Predicated region
    $region18: #{tpu_custom_call.1} parent=1 // pred_check
      _
    $region19: #{tpu_custom_call.1} parent=1 // pred_check_branch
      %30 = sbr.rel (0) target = $region21
    $region20: #{tpu_custom_call.1} parent=1 // pred_region
      %s32 = ssub.s32 2048, 2048
      %33 = vsyncadd [#allocation3], %s32
      %s34 = sshll.u32 [#allocation2], 4
      %s35 = int_to_ptr.vmem [resolvable:$true] %s34
      %40 = dma.hbm_to_vmem [thread:$0]  %s4, 2048, %s35, [#allocation3], 64, 64, 4
    $region21: #{tpu_custom_call.1} parent=1 // pred_fallthru
      _
    // Predicated region
    $region22: #{tpu_custom_call.1} parent=1 // pred_check
      _
    $region23: #{tpu_custom_call.1} parent=1 // pred_check_branch
      %42 = sbr.rel (0) target = $region25
    $region24: #{tpu_custom_call.1} parent=1 // pred_region
      _
    $region25: #{tpu_custom_call.1} parent=1 // pred_fallthru
      _
    // Predicated region
    $region26: #{tpu_custom_call.1} parent=1 // pred_check
      _
    $region27: #{tpu_custom_call.1} parent=1 // pred_check_branch
      %44 = sbr.rel (0) target = $region29
    $region28: #{tpu_custom_call.1} parent=1 // pred_region
      %s46 = ssub.s32 1024, 1024
      %47 = vsyncadd [#allocation6], %s46
      %s48 = sshll.u32 [#allocation5], 4
      %s49 = int_to_ptr.vmem [resolvable:$true] %s48
      %54 = dma.hbm_to_vmem [thread:$0]  %s6, 1024, %s49, [#allocation6], 128, 128, 8
    $region29: #{tpu_custom_call.1} parent=1 // pred_fallthru
      _
    // Predicated region
    $region30: #{tpu_custom_call.1} parent=1 // pred_check
      _
    $region31: #{tpu_custom_call.1} parent=1 // pred_check_branch
      %56 = sbr.rel (0) target = $region33
    $region32: #{tpu_custom_call.1} parent=1 // pred_region
      _
    $region33: #{tpu_custom_call.1} parent=1 // pred_fallthru
      _
    // Predicated region
    $region34: #{tpu_custom_call.1} parent=1 // pred_check
      _
    $region35: #{tpu_custom_call.1} parent=1 // pred_check_branch
      %58 = sbr.rel (0) target = $region37
    $region36: #{tpu_custom_call.1} parent=1 // pred_region
      %s60 = ssub.s32 2048, 2048
      %61 = vsyncadd [#allocation6], %s60
      %s62 = sshll.u32 [#allocation7], 4
      %s63 = int_to_ptr.vmem [resolvable:$true] %s62
      %68 = dma.hbm_to_vmem [thread:$0]  %s8, 2048, %s63, [#allocation6], 64, 64, 4
    $region37: #{tpu_custom_call.1} parent=1 // pred_fallthru
      _
    // Predicated region
    $region38: #{tpu_custom_call.1} parent=1 // pred_check
      _
    $region39: #{tpu_custom_call.1} parent=1 // pred_check_branch
      %70 = sbr.rel (0) target = $region41
    $region40: #{tpu_custom_call.1} parent=1 // pred_region
      _
    $region41: #{tpu_custom_call.1} parent=1 // pred_fallthru
      _
    // Predicated region
    $region42: #{tpu_custom_call.1} parent=1 // pred_check
      _
    $region43: #{tpu_custom_call.1} parent=1 // pred_check_branch
      %72 = sbr.rel (0) target = $region45
    $region44: #{tpu_custom_call.1} parent=1 // pred_region
      %73 = dma.done [#allocation3], 2048
    $region45: #{tpu_custom_call.1} parent=1 // pred_fallthru
      _
    // Predicated region
    $region46: #{tpu_custom_call.1} parent=1 // pred_check
      _
    $region47: #{tpu_custom_call.1} parent=1 // pred_check_branch
      %75 = sbr.rel (0) target = $region49
    $region48: #{tpu_custom_call.1} parent=1 // pred_region
      %76 = dma.done [#allocation6], 1024
    $region49: #{tpu_custom_call.1} parent=1 // pred_fallthru
      _
    // Predicated region
    $region50: #{tpu_custom_call.1} parent=1 // pred_check
      _
    $region51: #{tpu_custom_call.1} parent=1 // pred_check_branch
      %78 = sbr.rel (0) target = $region53
    $region52: #{tpu_custom_call.1} parent=1 // pred_region
      %79 = dma.done [#allocation6], 2048
    $region53: #{tpu_custom_call.1} parent=1 // pred_fallthru
      _
    %v81 = vld [vmem:[%s0] sm:$0xf]
    %v82 = vld [vmem:[%s0 + $0x4] sm:$0xf]
    %v83 = vld [vmem:[%s0 + $0x8] sm:$0xf]
    %v84 = vld [vmem:[%s0 + $0xc] sm:$0xf]
    %v85 = vld [vmem:[%s0 + $0x10] sm:$0xf]
    %v86 = vld [vmem:[%s0 + $0x14] sm:$0xf]
    %v87 = vld [vmem:[%s0 + $0x18] sm:$0xf]
    %v88 = vld [vmem:[%s0 + $0x1c] sm:$0xf]
    %v89 = vld [vmem:[%s0 + $0x20] sm:$0xf]
    %v90 = vld [vmem:[%s0 + $0x24] sm:$0xf]
    %v91 = vld [vmem:[%s0 + $0x28] sm:$0xf]
    %v92 = vld [vmem:[%s0 + $0x2c] sm:$0xf]
    %v93 = vld [vmem:[%s0 + $0x30] sm:$0xf]
    %v94 = vld [vmem:[%s0 + $0x34] sm:$0xf]
    %v95 = vld [vmem:[%s0 + $0x38] sm:$0xf]
    %v96 = vld [vmem:[%s0 + $0x3c] sm:$0xf]
    %v97 = vld [vmem:[%s2] sm:$0xff]
    %v98 = vld [vmem:[%s2 + $0x8] sm:$0xff]
    %v99 = vld [vmem:[%s2 + $0x10] sm:$0xff]
    %v100 = vld [vmem:[%s2 + $0x18] sm:$0xff]
    %v101 = vld [vmem:[%s2 + $0x20] sm:$0xff]
    %v102 = vld [vmem:[%s2 + $0x28] sm:$0xff]
    %v103 = vld [vmem:[%s2 + $0x30] sm:$0xff]
    %v104 = vld [vmem:[%s2 + $0x38] sm:$0xff]
    %v105 = vld [vmem:[%s2 + $0x40] sm:$0xff]
    %v106 = vld [vmem:[%s2 + $0x48] sm:$0xff]
    %v107 = vld [vmem:[%s2 + $0x50] sm:$0xff]
    %v108 = vld [vmem:[%s2 + $0x58] sm:$0xff]
    %v109 = vld [vmem:[%s2 + $0x60] sm:$0xff]
    %v110 = vld [vmem:[%s2 + $0x68] sm:$0xff]
    %v111 = vld [vmem:[%s2 + $0x70] sm:$0xff]
    %v112 = vld [vmem:[%s2 + $0x78] sm:$0xff]
    %v113 = vld [vmem:[%s3] sm:$0x3]
    %v115 = vlaneseq
    %v116 = vshrl.u32 %v115, 7
    %v117 = vsub.s32 0, %v116
    %v118 = vrot.slane %v113, %v117
    %v119 = vlaneseq
    %v120 = vshrl.u32 %v119, 7
    %v121 = vsub.s32 1, %v120
    %v122 = vrot.slane %v113, %v121
    %v141 = vunpack.c.l.b16 %v81
    %v142 = vunpack.c.l.b16 %v82
    %v143 = vunpack.c.l.b16 %v83
    %v144 = vunpack.c.l.b16 %v84
    %v145 = vunpack.c.l.b16 %v85
    %v146 = vunpack.c.l.b16 %v86
    %v147 = vunpack.c.l.b16 %v87
    %v148 = vunpack.c.l.b16 %v88
    %v149 = vunpack.c.l.b16 %v89
    %v150 = vunpack.c.l.b16 %v90
    %v151 = vunpack.c.l.b16 %v91
    %v152 = vunpack.c.l.b16 %v92
    %v153 = vunpack.c.l.b16 %v93
    %v154 = vunpack.c.l.b16 %v94
    %v155 = vunpack.c.l.b16 %v95
    %v156 = vunpack.c.l.b16 %v96
    %v157 = vpack.c.b16 %v142, %v141
    %v158 = vpack.c.b16 %v144, %v143
    %v159 = vpack.c.b16 %v146, %v145
    %v160 = vpack.c.b16 %v148, %v147
    %v161 = vpack.c.b16 %v150, %v149
    %v162 = vpack.c.b16 %v152, %v151
    %v163 = vpack.c.b16 %v154, %v153
    %v164 = vpack.c.b16 %v156, %v155
    %v189 = vunpack.c.l.b16 %v97
    %v190 = vunpack.c.h.b16 %v97
    %v191 = vunpack.c.l.b16 %v98
    %v192 = vunpack.c.h.b16 %v98
    %v193 = vunpack.c.l.b16 %v99
    %v194 = vunpack.c.h.b16 %v99
    %v195 = vunpack.c.l.b16 %v100
    %v196 = vunpack.c.h.b16 %v100
    %v197 = vunpack.c.l.b16 %v101
    %v198 = vunpack.c.h.b16 %v101
    %v199 = vunpack.c.l.b16 %v102
    %v200 = vunpack.c.h.b16 %v102
    %v201 = vunpack.c.l.b16 %v103
    %v202 = vunpack.c.h.b16 %v103
    %v203 = vunpack.c.l.b16 %v104
    %v204 = vunpack.c.h.b16 %v104
    %v205 = vunpack.c.l.b16 %v105
    %v206 = vunpack.c.h.b16 %v105
    %v207 = vunpack.c.l.b16 %v106
    %v208 = vunpack.c.h.b16 %v106
    %v209 = vunpack.c.l.b16 %v107
    %v210 = vunpack.c.h.b16 %v107
    %v211 = vunpack.c.l.b16 %v108
    %v212 = vunpack.c.h.b16 %v108
    %v213 = vunpack.c.l.b16 %v109
    %v214 = vunpack.c.h.b16 %v109
    %v215 = vunpack.c.l.b16 %v110
    %v216 = vunpack.c.h.b16 %v110
    %v217 = vunpack.c.l.b16 %v111
    %v218 = vunpack.c.h.b16 %v111
    %v219 = vunpack.c.l.b16 %v112
    %v220 = vunpack.c.h.b16 %v112
    %v221 = vpack.c.b16 %v191, %v189
    %v222 = vpack.c.b16 %v192, %v190
    %v223 = vpack.c.b16 %v195, %v193
    %v224 = vpack.c.b16 %v196, %v194
    %v225 = vpack.c.b16 %v199, %v197
    %v226 = vpack.c.b16 %v200, %v198
    %v227 = vpack.c.b16 %v203, %v201
    %v228 = vpack.c.b16 %v204, %v202
    %v229 = vpack.c.b16 %v207, %v205
    %v230 = vpack.c.b16 %v208, %v206
    %v231 = vpack.c.b16 %v211, %v209
    %v232 = vpack.c.b16 %v212, %v210
    %v233 = vpack.c.b16 %v215, %v213
    %v234 = vpack.c.b16 %v216, %v214
    %v235 = vpack.c.b16 %v219, %v217
    %v236 = vpack.c.b16 %v220, %v218
    %253 = vmatprep.subr.bf16.mxu0 %v222
    %254 = vmatpush1.bf16.msra.mxu0 %v221
    %255 = vmatprep.subr.bf16.mxu0 %v224
    %256 = vmatpush1.bf16.msra.mxu0 %v223
    %257 = vmatprep.subr.bf16.mxu0 %v226
    %258 = vmatpush1.bf16.msra.mxu0 %v225
    %259 = vmatprep.subr.bf16.mxu0 %v228
    %260 = vmatpush1.bf16.msra.mxu0 %v227
    %261 = vmatprep.subr.bf16.mxu0 %v230
    %262 = vmatpush1.bf16.msra.mxu0 %v229
    %263 = vmatprep.subr.bf16.mxu0 %v232
    %264 = vmatpush1.bf16.msra.mxu0 %v231
    %265 = vmatprep.subr.bf16.mxu0 %v234
    %266 = vmatpush1.bf16.msra.mxu0 %v233
    %267 = vmatprep.subr.bf16.mxu0 %v236
    %268 = vmatpush1.bf16.msra.mxu0 %v235
    %269 = vmatprep.subr.bf16.mxu0 0
    %270 = vmatpush1.bf16.msra.mxu0 0
    %271 = vmatprep.subr.bf16.mxu0 0
    %272 = vmatpush1.bf16.msra.mxu0 0
    %273 = vmatprep.subr.bf16.mxu0 0
    %274 = vmatpush1.bf16.msra.mxu0 0
    %275 = vmatprep.subr.bf16.mxu0 0
    %276 = vmatpush1.bf16.msra.mxu0 0
    %277 = vmatprep.subr.bf16.mxu0 0
    %278 = vmatpush1.bf16.msra.mxu0 0
    %279 = vmatprep.subr.bf16.mxu0 0
    %280 = vmatpush1.bf16.msra.mxu0 0
    %281 = vmatprep.subr.bf16.mxu0 0
    %282 = vmatpush1.bf16.msra.mxu0 0
    %283 = vmatprep.subr.bf16.mxu0 0
    %284 = vmatpush1.bf16.msra.mxu0 0
    %285 = vmatprep.mubr.bf16.mxu0 0
    %286 = vmatmul.mubr.bf16.gmra.mrb[0].mxu0 %v157
    %v287 = vpop.f32.mrb[0].mxu0
    %v288 = vadd.f32 %v118, %v287
    %v289 = vpop.f32.mrb[0].mxu0
    %v290 = vadd.f32 %v122, %v289
    %v291 = vpop.f32.mrb[0].mxu0
    %v292 = vadd.f32 %v118, %v291
    %v293 = vpop.f32.mrb[0].mxu0
    %v294 = vadd.f32 %v122, %v293
    %295 = vmatprep.mubr.bf16.mxu0 0
    %296 = vmatmul.mubr.bf16.gmra.mrb[0].mxu0 %v158
    %v297 = vpop.f32.mrb[0].mxu0
    %v298 = vadd.f32 %v118, %v297
    %v299 = vpop.f32.mrb[0].mxu0
    %v300 = vadd.f32 %v122, %v299
    %v301 = vpop.f32.mrb[0].mxu0
    %v302 = vadd.f32 %v118, %v301
    %v303 = vpop.f32.mrb[0].mxu0
    %v304 = vadd.f32 %v122, %v303
    %305 = vmatprep.mubr.bf16.mxu0 0
    %306 = vmatmul.mubr.bf16.gmra.mrb[0].mxu0 %v159
    %v307 = vpop.f32.mrb[0].mxu0
    %v308 = vadd.f32 %v118, %v307
    %v309 = vpop.f32.mrb[0].mxu0
    %v310 = vadd.f32 %v122, %v309
    %v311 = vpop.f32.mrb[0].mxu0
    %v312 = vadd.f32 %v118, %v311
    %v313 = vpop.f32.mrb[0].mxu0
    %v314 = vadd.f32 %v122, %v313
    %315 = vmatprep.mubr.bf16.mxu0 0
    %316 = vmatmul.mubr.bf16.gmra.mrb[0].mxu0 %v160
    %v317 = vpop.f32.mrb[0].mxu0
    %v318 = vadd.f32 %v118, %v317
    %v319 = vpop.f32.mrb[0].mxu0
    %v320 = vadd.f32 %v122, %v319
    %v321 = vpop.f32.mrb[0].mxu0
    %v322 = vadd.f32 %v118, %v321
    %v323 = vpop.f32.mrb[0].mxu0
    %v324 = vadd.f32 %v122, %v323
    %325 = vmatprep.mubr.bf16.mxu0 0
    %326 = vmatmul.mubr.bf16.gmra.mrb[0].mxu0 %v161
    %v327 = vpop.f32.mrb[0].mxu0
    %v328 = vadd.f32 %v118, %v327
    %v329 = vpop.f32.mrb[0].mxu0
    %v330 = vadd.f32 %v122, %v329
    %v331 = vpop.f32.mrb[0].mxu0
    %v332 = vadd.f32 %v118, %v331
    %v333 = vpop.f32.mrb[0].mxu0
    %v334 = vadd.f32 %v122, %v333
    %335 = vmatprep.mubr.bf16.mxu0 0
    %336 = vmatmul.mubr.bf16.gmra.mrb[0].mxu0 %v162
    %v337 = vpop.f32.mrb[0].mxu0
    %v338 = vadd.f32 %v118, %v337
    %v339 = vpop.f32.mrb[0].mxu0
    %v340 = vadd.f32 %v122, %v339
    %v341 = vpop.f32.mrb[0].mxu0
    %v342 = vadd.f32 %v118, %v341
    %v343 = vpop.f32.mrb[0].mxu0
    %v344 = vadd.f32 %v122, %v343
    %345 = vmatprep.mubr.bf16.mxu0 0
    %346 = vmatmul.mubr.bf16.gmra.mrb[0].mxu0 %v163
    %v347 = vpop.f32.mrb[0].mxu0
    %v348 = vadd.f32 %v118, %v347
    %v349 = vpop.f32.mrb[0].mxu0
    %v350 = vadd.f32 %v122, %v349
    %v351 = vpop.f32.mrb[0].mxu0
    %v352 = vadd.f32 %v118, %v351
    %v353 = vpop.f32.mrb[0].mxu0
    %v354 = vadd.f32 %v122, %v353
    %355 = vmatprep.mubr.bf16.mxu0 0
    %356 = vmatmul.mubr.bf16.gmra.mrb[0].mxu0 %v164
    %v357 = vpop.f32.mrb[0].mxu0
    %v358 = vadd.f32 %v118, %v357
    %v359 = vpop.f32.mrb[0].mxu0
    %v360 = vadd.f32 %v122, %v359
    %v361 = vpop.f32.mrb[0].mxu0
    %v362 = vadd.f32 %v118, %v361
    %v363 = vpop.f32.mrb[0].mxu0
    %v364 = vadd.f32 %v122, %v363
    %365 = vdwg.mxu0
    %v366 = vmax.f32 %v288, 0.0
    %v367 = vmax.f32 %v290, 0.0
    %v368 = vmax.f32 %v292, 0.0
    %v369 = vmax.f32 %v294, 0.0
    %v370 = vmax.f32 %v298, 0.0
    %v371 = vmax.f32 %v300, 0.0
    %v372 = vmax.f32 %v302, 0.0
    %v373 = vmax.f32 %v304, 0.0
    %v374 = vmax.f32 %v308, 0.0
    %v375 = vmax.f32 %v310, 0.0
    %v376 = vmax.f32 %v312, 0.0
    %v377 = vmax.f32 %v314, 0.0
    %v378 = vmax.f32 %v318, 0.0
    %v379 = vmax.f32 %v320, 0.0
    %v380 = vmax.f32 %v322, 0.0
    %v381 = vmax.f32 %v324, 0.0
    %v382 = vmax.f32 %v328, 0.0
    %v383 = vmax.f32 %v330, 0.0
    %v384 = vmax.f32 %v332, 0.0
    %v385 = vmax.f32 %v334, 0.0
    %v386 = vmax.f32 %v338, 0.0
    %v387 = vmax.f32 %v340, 0.0
    %v388 = vmax.f32 %v342, 0.0
    %v389 = vmax.f32 %v344, 0.0
    %v390 = vmax.f32 %v348, 0.0
    %v391 = vmax.f32 %v350, 0.0
    %v392 = vmax.f32 %v352, 0.0
    %v393 = vmax.f32 %v354, 0.0
    %v394 = vmax.f32 %v358, 0.0
    %v395 = vmax.f32 %v360, 0.0
    %v396 = vmax.f32 %v362, 0.0
    %v397 = vmax.f32 %v364, 0.0
    %v398 = vpack.c.bf16 %v368, %v366
    %v399 = vpack.c.bf16 %v369, %v367
    %v400 = vpack.c.bf16 %v372, %v370
    %v401 = vpack.c.bf16 %v373, %v371
    %v402 = vpack.c.bf16 %v376, %v374
    %v403 = vpack.c.bf16 %v377, %v375
    %v404 = vpack.c.bf16 %v380, %v378
    %v405 = vpack.c.bf16 %v381, %v379
    %v406 = vpack.c.bf16 %v384, %v382
    %v407 = vpack.c.bf16 %v385, %v383
    %v408 = vpack.c.bf16 %v388, %v386
    %v409 = vpack.c.bf16 %v389, %v387
    %v410 = vpack.c.bf16 %v392, %v390
    %v411 = vpack.c.bf16 %v393, %v391
    %v412 = vpack.c.bf16 %v396, %v394
    %v413 = vpack.c.bf16 %v397, %v395
    %v414 = vld [vmem:[#allocation2] sm:$0xf]
    %v415 = vld [vmem:[#allocation2 + $0x4] sm:$0xf]
    %v416 = vld [vmem:[#allocation2 + $0x8] sm:$0xf]
    %v417 = vld [vmem:[#allocation2 + $0xc] sm:$0xf]
    %v418 = vld [vmem:[#allocation2 + $0x10] sm:$0xf]
    %v419 = vld [vmem:[#allocation2 + $0x14] sm:$0xf]
    %v420 = vld [vmem:[#allocation2 + $0x18] sm:$0xf]
    %v421 = vld [vmem:[#allocation2 + $0x1c] sm:$0xf]
    %v422 = vld [vmem:[#allocation2 + $0x20] sm:$0xf]
    %v423 = vld [vmem:[#allocation2 + $0x24] sm:$0xf]
    %v424 = vld [vmem:[#allocation2 + $0x28] sm:$0xf]
    %v425 = vld [vmem:[#allocation2 + $0x2c] sm:$0xf]
    %v426 = vld [vmem:[#allocation2 + $0x30] sm:$0xf]
    %v427 = vld [vmem:[#allocation2 + $0x34] sm:$0xf]
    %v428 = vld [vmem:[#allocation2 + $0x38] sm:$0xf]
    %v429 = vld [vmem:[#allocation2 + $0x3c] sm:$0xf]
    %v430 = vld [vmem:[#allocation2 + $0x40] sm:$0xf]
    %v431 = vld [vmem:[#allocation2 + $0x44] sm:$0xf]
    %v432 = vld [vmem:[#allocation2 + $0x48] sm:$0xf]
    %v433 = vld [vmem:[#allocation2 + $0x4c] sm:$0xf]
    %v434 = vld [vmem:[#allocation2 + $0x50] sm:$0xf]
    %v435 = vld [vmem:[#allocation2 + $0x54] sm:$0xf]
    %v436 = vld [vmem:[#allocation2 + $0x58] sm:$0xf]
    %v437 = vld [vmem:[#allocation2 + $0x5c] sm:$0xf]
    %v438 = vld [vmem:[#allocation2 + $0x60] sm:$0xf]
    %v439 = vld [vmem:[#allocation2 + $0x64] sm:$0xf]
    %v440 = vld [vmem:[#allocation2 + $0x68] sm:$0xf]
    %v441 = vld [vmem:[#allocation2 + $0x6c] sm:$0xf]
    %v442 = vld [vmem:[#allocation2 + $0x70] sm:$0xf]
    %v443 = vld [vmem:[#allocation2 + $0x74] sm:$0xf]
    %v444 = vld [vmem:[#allocation2 + $0x78] sm:$0xf]
    %v445 = vld [vmem:[#allocation2 + $0x7c] sm:$0xf]
    %v446 = vld [vmem:[%s5] sm:$0x1]
    %v448 = vlaneseq
    %v449 = vshrl.u32 %v448, 7
    %v450 = vsub.s32 0, %v449
    %v451 = vrot.slane %v446, %v450
    %v485 = vunpack.c.l.b16 %v414
    %v486 = vunpack.c.l.b16 %v415
    %v487 = vunpack.c.l.b16 %v416
    %v488 = vunpack.c.l.b16 %v417
    %v489 = vunpack.c.l.b16 %v418
    %v490 = vunpack.c.l.b16 %v419
    %v491 = vunpack.c.l.b16 %v420
    %v492 = vunpack.c.l.b16 %v421
    %v493 = vunpack.c.l.b16 %v422
    %v494 = vunpack.c.l.b16 %v423
    %v495 = vunpack.c.l.b16 %v424
    %v496 = vunpack.c.l.b16 %v425
    %v497 = vunpack.c.l.b16 %v426
    %v498 = vunpack.c.l.b16 %v427
    %v499 = vunpack.c.l.b16 %v428
    %v500 = vunpack.c.l.b16 %v429
    %v501 = vunpack.c.l.b16 %v430
    %v502 = vunpack.c.l.b16 %v431
    %v503 = vunpack.c.l.b16 %v432
    %v504 = vunpack.c.l.b16 %v433
    %v505 = vunpack.c.l.b16 %v434
    %v506 = vunpack.c.l.b16 %v435
    %v507 = vunpack.c.l.b16 %v436
    %v508 = vunpack.c.l.b16 %v437
    %v509 = vunpack.c.l.b16 %v438
    %v510 = vunpack.c.l.b16 %v439
    %v511 = vunpack.c.l.b16 %v440
    %v512 = vunpack.c.l.b16 %v441
    %v513 = vunpack.c.l.b16 %v442
    %v514 = vunpack.c.l.b16 %v443
    %v515 = vunpack.c.l.b16 %v444
    %v516 = vunpack.c.l.b16 %v445
    %v517 = vpack.c.b16 %v486, %v485
    %v518 = vpack.c.b16 %v488, %v487
    %v519 = vpack.c.b16 %v490, %v489
    %v520 = vpack.c.b16 %v492, %v491
    %v521 = vpack.c.b16 %v494, %v493
    %v522 = vpack.c.b16 %v496, %v495
    %v523 = vpack.c.b16 %v498, %v497
    %v524 = vpack.c.b16 %v500, %v499
    %v525 = vpack.c.b16 %v502, %v501
    %v526 = vpack.c.b16 %v504, %v503
    %v527 = vpack.c.b16 %v506, %v505
    %v528 = vpack.c.b16 %v508, %v507
    %v529 = vpack.c.b16 %v510, %v509
    %v530 = vpack.c.b16 %v512, %v511
    %v531 = vpack.c.b16 %v514, %v513
    %v532 = vpack.c.b16 %v516, %v515
    %549 = vmatprep.subr.bf16.mxu0 0
    %550 = vmatpush1.bf16.msra.mxu0 %v517
    %551 = vmatprep.subr.bf16.mxu0 0
    %552 = vmatpush1.bf16.msra.mxu0 %v518
    %553 = vmatprep.subr.bf16.mxu0 0
    %554 = vmatpush1.bf16.msra.mxu0 %v519
    %555 = vmatprep.subr.bf16.mxu0 0
    %556 = vmatpush1.bf16.msra.mxu0 %v520
    %557 = vmatprep.subr.bf16.mxu0 0
    %558 = vmatpush1.bf16.msra.mxu0 %v521
    %559 = vmatprep.subr.bf16.mxu0 0
    %560 = vmatpush1.bf16.msra.mxu0 %v522
    %561 = vmatprep.subr.bf16.mxu0 0
    %562 = vmatpush1.bf16.msra.mxu0 %v523
    %563 = vmatprep.subr.bf16.mxu0 0
    %564 = vmatpush1.bf16.msra.mxu0 %v524
    %565 = vmatprep.subr.bf16.mxu0 0
    %566 = vmatpush1.bf16.msra.mxu0 %v525
    %567 = vmatprep.subr.bf16.mxu0 0
    %568 = vmatpush1.bf16.msra.mxu0 %v526
    %569 = vmatprep.subr.bf16.mxu0 0
    %570 = vmatpush1.bf16.msra.mxu0 %v527
    %571 = vmatprep.subr.bf16.mxu0 0
    %572 = vmatpush1.bf16.msra.mxu0 %v528
    %573 = vmatprep.subr.bf16.mxu0 0
    %574 = vmatpush1.bf16.msra.mxu0 %v529
    %575 = vmatprep.subr.bf16.mxu0 0
    %576 = vmatpush1.bf16.msra.mxu0 %v530
    %577 = vmatprep.subr.bf16.mxu0 0
    %578 = vmatpush1.bf16.msra.mxu0 %v531
    %579 = vmatprep.subr.bf16.mxu0 0
    %580 = vmatpush1.bf16.msra.mxu0 %v532
    %581 = vmatprep.mubr.bf16.mxu0 %v399
    %582 = vmatmul.mubr.bf16.gmra.mrb[0].mxu0 %v398
    %v583 = vpop.f32.mrb[0].mxu0
    %v584 = vadd.f32 %v451, %v583
    %v585 = vpop.f32.mrb[0].mxu0
    %v586 = vpop.f32.mrb[0].mxu0
    %v587 = vadd.f32 %v451, %v586
    %v588 = vpop.f32.mrb[0].mxu0
    %589 = vmatprep.mubr.bf16.mxu0 %v401
    %590 = vmatmul.mubr.bf16.gmra.mrb[0].mxu0 %v400
    %v591 = vpop.f32.mrb[0].mxu0
    %v592 = vadd.f32 %v451, %v591
    %v593 = vpop.f32.mrb[0].mxu0
    %v594 = vpop.f32.mrb[0].mxu0
    %v595 = vadd.f32 %v451, %v594
    %v596 = vpop.f32.mrb[0].mxu0
    %597 = vmatprep.mubr.bf16.mxu0 %v403
    %598 = vmatmul.mubr.bf16.gmra.mrb[0].mxu0 %v402
    %v599 = vpop.f32.mrb[0].mxu0
    %v600 = vadd.f32 %v451, %v599
    %v601 = vpop.f32.mrb[0].mxu0
    %v602 = vpop.f32.mrb[0].mxu0
    %v603 = vadd.f32 %v451, %v602
    %v604 = vpop.f32.mrb[0].mxu0
    %605 = vmatprep.mubr.bf16.mxu0 %v405
    %606 = vmatmul.mubr.bf16.gmra.mrb[0].mxu0 %v404
    %v607 = vpop.f32.mrb[0].mxu0
    %v608 = vadd.f32 %v451, %v607
    %v609 = vpop.f32.mrb[0].mxu0
    %v610 = vpop.f32.mrb[0].mxu0
    %v611 = vadd.f32 %v451, %v610
    %v612 = vpop.f32.mrb[0].mxu0
    %613 = vmatprep.mubr.bf16.mxu0 %v407
    %614 = vmatmul.mubr.bf16.gmra.mrb[0].mxu0 %v406
    %v615 = vpop.f32.mrb[0].mxu0
    %v616 = vadd.f32 %v451, %v615
    %v617 = vpop.f32.mrb[0].mxu0
    %v618 = vpop.f32.mrb[0].mxu0
    %v619 = vadd.f32 %v451, %v618
    %v620 = vpop.f32.mrb[0].mxu0
    %621 = vmatprep.mubr.bf16.mxu0 %v409
    %622 = vmatmul.mubr.bf16.gmra.mrb[0].mxu0 %v408
    %v623 = vpop.f32.mrb[0].mxu0
    %v624 = vadd.f32 %v451, %v623
    %v625 = vpop.f32.mrb[0].mxu0
    %v626 = vpop.f32.mrb[0].mxu0
    %v627 = vadd.f32 %v451, %v626
    %v628 = vpop.f32.mrb[0].mxu0
    %629 = vmatprep.mubr.bf16.mxu0 %v411
    %630 = vmatmul.mubr.bf16.gmra.mrb[0].mxu0 %v410
    %v631 = vpop.f32.mrb[0].mxu0
    %v632 = vadd.f32 %v451, %v631
    %v633 = vpop.f32.mrb[0].mxu0
    %v634 = vpop.f32.mrb[0].mxu0
    %v635 = vadd.f32 %v451, %v634
    %v636 = vpop.f32.mrb[0].mxu0
    %637 = vmatprep.mubr.bf16.mxu0 %v413
    %638 = vmatmul.mubr.bf16.gmra.mrb[0].mxu0 %v412
    %v639 = vpop.f32.mrb[0].mxu0
    %v640 = vadd.f32 %v451, %v639
    %v641 = vpop.f32.mrb[0].mxu0
    %v642 = vpop.f32.mrb[0].mxu0
    %v643 = vadd.f32 %v451, %v642
    %v644 = vpop.f32.mrb[0].mxu0
    %645 = vdwg.mxu0
    %646 = vst [vmem:[#allocation9] sm:$0xff] %v584
    %647 = vst [vmem:[#allocation9 + $0x8] sm:$0xff] %v587
    %648 = vst [vmem:[#allocation9 + $0x10] sm:$0xff] %v592
    %649 = vst [vmem:[#allocation9 + $0x18] sm:$0xff] %v595
    %650 = vst [vmem:[#allocation9 + $0x20] sm:$0xff] %v600
    %651 = vst [vmem:[#allocation9 + $0x28] sm:$0xff] %v603
    %652 = vst [vmem:[#allocation9 + $0x30] sm:$0xff] %v608
    %653 = vst [vmem:[#allocation9 + $0x38] sm:$0xff] %v611
    %654 = vst [vmem:[#allocation9 + $0x40] sm:$0xff] %v616
    %655 = vst [vmem:[#allocation9 + $0x48] sm:$0xff] %v619
    %656 = vst [vmem:[#allocation9 + $0x50] sm:$0xff] %v624
    %657 = vst [vmem:[#allocation9 + $0x58] sm:$0xff] %v627
    %658 = vst [vmem:[#allocation9 + $0x60] sm:$0xff] %v632
    %659 = vst [vmem:[#allocation9 + $0x68] sm:$0xff] %v635
    %660 = vst [vmem:[#allocation9 + $0x70] sm:$0xff] %v640
    %661 = vst [vmem:[#allocation9 + $0x78] sm:$0xff] %v643
    %v662 = vmul.f32 %v584, 0.5
    %v663 = vmul.f32 %v587, 0.5
    %v664 = vmul.f32 %v592, 0.5
    %v665 = vmul.f32 %v595, 0.5
    %v666 = vmul.f32 %v600, 0.5
    %v667 = vmul.f32 %v603, 0.5
    %v668 = vmul.f32 %v608, 0.5
    %v669 = vmul.f32 %v611, 0.5
    %v670 = vmul.f32 %v616, 0.5
    %v671 = vmul.f32 %v619, 0.5
    %v672 = vmul.f32 %v624, 0.5
    %v673 = vmul.f32 %v627, 0.5
    %v674 = vmul.f32 %v632, 0.5
    %v675 = vmul.f32 %v635, 0.5
    %v676 = vmul.f32 %v640, 0.5
    %v677 = vmul.f32 %v643, 0.5
    %v678 = vmul.f32 %v662, 1.442695
    %v679 = vpow.pop %v678
    %v680 = vmul.f32 %v663, 1.442695
    %v681 = vpow.pop %v680
    %v682 = vmul.f32 %v664, 1.442695
    %v683 = vpow.pop %v682
    %v684 = vmul.f32 %v665, 1.442695
    %v685 = vpow.pop %v684
    %v686 = vmul.f32 %v666, 1.442695
    %v687 = vpow.pop %v686
    %v688 = vmul.f32 %v667, 1.442695
    %v689 = vpow.pop %v688
    %v690 = vmul.f32 %v668, 1.442695
    %v691 = vpow.pop %v690
    %v692 = vmul.f32 %v669, 1.442695
    %v693 = vpow.pop %v692
    %v694 = vmul.f32 %v670, 1.442695
    %v695 = vpow.pop %v694
    %v696 = vmul.f32 %v671, 1.442695
    %v697 = vpow.pop %v696
    %v698 = vmul.f32 %v672, 1.442695
    %v699 = vpow.pop %v698
    %v700 = vmul.f32 %v673, 1.442695
    %v701 = vpow.pop %v700
    %v702 = vmul.f32 %v674, 1.442695
    %v703 = vpow.pop %v702
    %v704 = vmul.f32 %v675, 1.442695
    %v705 = vpow.pop %v704
    %v706 = vmul.f32 %v676, 1.442695
    %v707 = vpow.pop %v706
    %v708 = vmul.f32 %v677, 1.442695
    %v709 = vpow.pop %v708
    %v710 = vld [vmem:[%s1] sm:$0xff]
    %v711 = vld [vmem:[%s1 + $0x8] sm:$0xff]
    %v712 = vld [vmem:[%s1 + $0x10] sm:$0xff]
    %v713 = vld [vmem:[%s1 + $0x18] sm:$0xff]
    %v714 = vld [vmem:[%s1 + $0x20] sm:$0xff]
    %v715 = vld [vmem:[%s1 + $0x28] sm:$0xff]
    %v716 = vld [vmem:[%s1 + $0x30] sm:$0xff]
    %v717 = vld [vmem:[%s1 + $0x38] sm:$0xff]
    %v718 = vld [vmem:[%s1 + $0x40] sm:$0xff]
    %v719 = vld [vmem:[%s1 + $0x48] sm:$0xff]
    %v720 = vld [vmem:[%s1 + $0x50] sm:$0xff]
    %v721 = vld [vmem:[%s1 + $0x58] sm:$0xff]
    %v722 = vld [vmem:[%s1 + $0x60] sm:$0xff]
    %v723 = vld [vmem:[%s1 + $0x68] sm:$0xff]
    %v724 = vld [vmem:[%s1 + $0x70] sm:$0xff]
    %v725 = vld [vmem:[%s1 + $0x78] sm:$0xff]
    %742 = vrot.lane.b32.xlu0 %v679, 64
    %v743 = vpop.permute.xlu0 %742
    %744 = vrot.lane.b32.xlu0 %v681, 64
    %v745 = vpop.permute.xlu0 %744
    %746 = vrot.lane.b32.xlu0 %v683, 64
    %v747 = vpop.permute.xlu0 %746
    %748 = vrot.lane.b32.xlu0 %v685, 64
    %v749 = vpop.permute.xlu0 %748
    %750 = vrot.lane.b32.xlu0 %v687, 64
    %v751 = vpop.permute.xlu0 %750
    %752 = vrot.lane.b32.xlu0 %v689, 64
    %v753 = vpop.permute.xlu0 %752
    %754 = vrot.lane.b32.xlu0 %v691, 64
    %v755 = vpop.permute.xlu0 %754
    %756 = vrot.lane.b32.xlu0 %v693, 64
    %v757 = vpop.permute.xlu0 %756
    %758 = vrot.lane.b32.xlu0 %v695, 64
    %v759 = vpop.permute.xlu0 %758
    %760 = vrot.lane.b32.xlu0 %v697, 64
    %v761 = vpop.permute.xlu0 %760
    %762 = vrot.lane.b32.xlu0 %v699, 64
    %v763 = vpop.permute.xlu0 %762
    %764 = vrot.lane.b32.xlu0 %v701, 64
    %v765 = vpop.permute.xlu0 %764
    %766 = vrot.lane.b32.xlu0 %v703, 64
    %v767 = vpop.permute.xlu0 %766
    %768 = vrot.lane.b32.xlu0 %v705, 64
    %v769 = vpop.permute.xlu0 %768
    %770 = vrot.lane.b32.xlu0 %v707, 64
    %v771 = vpop.permute.xlu0 %770
    %772 = vrot.lane.b32.xlu0 %v709, 64
    %v773 = vpop.permute.xlu0 %772
    %v790 = vmul.f32 %v710, %v743
    %v791 = vmul.f32 %v711, %v745
    %v792 = vmul.f32 %v712, %v747
    %v793 = vmul.f32 %v713, %v749
    %v794 = vmul.f32 %v714, %v751
    %v795 = vmul.f32 %v715, %v753
    %v796 = vmul.f32 %v716, %v755
    %v797 = vmul.f32 %v717, %v757
    %v798 = vmul.f32 %v718, %v759
    %v799 = vmul.f32 %v719, %v761
    %v800 = vmul.f32 %v720, %v763
    %v801 = vmul.f32 %v721, %v765
    %v802 = vmul.f32 %v722, %v767
    %v803 = vmul.f32 %v723, %v769
    %v804 = vmul.f32 %v724, %v771
    %v805 = vmul.f32 %v725, %v773
    %v806 = vadd.f32 %v584, %v790
    %v807 = vadd.f32 %v587, %v791
    %v808 = vadd.f32 %v592, %v792
    %v809 = vadd.f32 %v595, %v793
    %v810 = vadd.f32 %v600, %v794
    %v811 = vadd.f32 %v603, %v795
    %v812 = vadd.f32 %v608, %v796
    %v813 = vadd.f32 %v611, %v797
    %v814 = vadd.f32 %v616, %v798
    %v815 = vadd.f32 %v619, %v799
    %v816 = vadd.f32 %v624, %v800
    %v817 = vadd.f32 %v627, %v801
    %v818 = vadd.f32 %v632, %v802
    %v819 = vadd.f32 %v635, %v803
    %v820 = vadd.f32 %v640, %v804
    %v821 = vadd.f32 %v643, %v805
    %v822 = vpack.c.bf16 %v807, %v806
    %v823 = vpack.c.bf16 %v809, %v808
    %v824 = vpack.c.bf16 %v811, %v810
    %v825 = vpack.c.bf16 %v813, %v812
    %v826 = vpack.c.bf16 %v815, %v814
    %v827 = vpack.c.bf16 %v817, %v816
    %v828 = vpack.c.bf16 %v819, %v818
    %v829 = vpack.c.bf16 %v821, %v820
    %v830 = vld [vmem:[#allocation5] sm:$0xff]
    %v831 = vld [vmem:[#allocation5 + $0x8] sm:$0xff]
    %v832 = vld [vmem:[#allocation5 + $0x10] sm:$0xff]
    %v833 = vld [vmem:[#allocation5 + $0x18] sm:$0xff]
    %v834 = vld [vmem:[#allocation5 + $0x20] sm:$0xff]
    %v835 = vld [vmem:[#allocation5 + $0x28] sm:$0xff]
    %v836 = vld [vmem:[#allocation5 + $0x30] sm:$0xff]
    %v837 = vld [vmem:[#allocation5 + $0x38] sm:$0xff]
    %v838 = vld [vmem:[%s7] sm:$0x3]
    %v840 = vlaneseq
    %v841 = vshrl.u32 %v840, 7
    %v842 = vsub.s32 0, %v841
    %v843 = vrot.slane %v838, %v842
    %v844 = vlaneseq
    %v845 = vshrl.u32 %v844, 7
    %v846 = vsub.s32 1, %v845
    %v847 = vrot.slane %v838, %v846
    %v858 = vunpack.c.l.b16 %v830
    %v859 = vunpack.c.h.b16 %v830
    %v860 = vunpack.c.l.b16 %v831
    %v861 = vunpack.c.h.b16 %v831
    %v862 = vunpack.c.l.b16 %v832
    %v863 = vunpack.c.h.b16 %v832
    %v864 = vunpack.c.l.b16 %v833
    %v865 = vunpack.c.h.b16 %v833
    %v866 = vunpack.c.l.b16 %v834
    %v867 = vunpack.c.h.b16 %v834
    %v868 = vunpack.c.l.b16 %v835
    %v869 = vunpack.c.h.b16 %v835
    %v870 = vunpack.c.l.b16 %v836
    %v871 = vunpack.c.h.b16 %v836
    %v872 = vunpack.c.l.b16 %v837
    %v873 = vunpack.c.h.b16 %v837
    %v874 = vpack.c.b16 %v860, %v858
    %v875 = vpack.c.b16 %v861, %v859
    %v876 = vpack.c.b16 %v864, %v862
    %v877 = vpack.c.b16 %v865, %v863
    %v878 = vpack.c.b16 %v868, %v866
    %v879 = vpack.c.b16 %v869, %v867
    %v880 = vpack.c.b16 %v872, %v870
    %v881 = vpack.c.b16 %v873, %v871
    %vm890 = vcmask 523264
    %v892 = vsel %vm890, %v822, 0
    %v895 = vsel %vm890, %v823, 0
    %v898 = vsel %vm890, %v824, 0
    %v901 = vsel %vm890, %v825, 0
    %v904 = vsel %vm890, %v826, 0
    %v907 = vsel %vm890, %v827, 0
    %v910 = vsel %vm890, %v828, 0
    %v913 = vsel %vm890, %v829, 0
    %915 = vmatprep.subr.bf16.mxu0 %v875
    %916 = vmatpush1.bf16.msra.mxu0 %v874
    %917 = vmatprep.subr.bf16.mxu0 %v877
    %918 = vmatpush1.bf16.msra.mxu0 %v876
    %919 = vmatprep.subr.bf16.mxu0 %v879
    %920 = vmatpush1.bf16.msra.mxu0 %v878
    %921 = vmatprep.subr.bf16.mxu0 %v881
    %922 = vmatpush1.bf16.msra.mxu0 %v880
    %923 = vmatprep.subr.bf16.mxu0 0
    %924 = vmatpush1.bf16.msra.mxu0 0
    %925 = vmatprep.subr.bf16.mxu0 0
    %926 = vmatpush1.bf16.msra.mxu0 0
    %927 = vmatprep.subr.bf16.mxu0 0
    %928 = vmatpush1.bf16.msra.mxu0 0
    %929 = vmatprep.subr.bf16.mxu0 0
    %930 = vmatpush1.bf16.msra.mxu0 0
    %931 = vmatprep.subr.bf16.mxu0 0
    %932 = vmatpush1.bf16.msra.mxu0 0
    %933 = vmatprep.subr.bf16.mxu0 0
    %934 = vmatpush1.bf16.msra.mxu0 0
    %935 = vmatprep.subr.bf16.mxu0 0
    %936 = vmatpush1.bf16.msra.mxu0 0
    %937 = vmatprep.subr.bf16.mxu0 0
    %938 = vmatpush1.bf16.msra.mxu0 0
    %939 = vmatprep.subr.bf16.mxu0 0
    %940 = vmatpush1.bf16.msra.mxu0 0
    %941 = vmatprep.subr.bf16.mxu0 0
    %942 = vmatpush1.bf16.msra.mxu0 0
    %943 = vmatprep.subr.bf16.mxu0 0
    %944 = vmatpush1.bf16.msra.mxu0 0
    %945 = vmatprep.subr.bf16.mxu0 0
    %946 = vmatpush1.bf16.msra.mxu0 0
    %947 = vmatprep.mubr.bf16.mxu0 0
    %948 = vmatmul.mubr.bf16.gmra.mrb[0].mxu0 %v892
    %v949 = vpop.f32.mrb[0].mxu0
    %v950 = vadd.f32 %v843, %v949
    %v951 = vpop.f32.mrb[0].mxu0
    %v952 = vadd.f32 %v847, %v951
    %v953 = vpop.f32.mrb[0].mxu0
    %v954 = vadd.f32 %v843, %v953
    %v955 = vpop.f32.mrb[0].mxu0
    %v956 = vadd.f32 %v847, %v955
    %957 = vmatprep.mubr.bf16.mxu0 0
    %958 = vmatmul.mubr.bf16.gmra.mrb[0].mxu0 %v895
    %v959 = vpop.f32.mrb[0].mxu0
    %v960 = vadd.f32 %v843, %v959
    %v961 = vpop.f32.mrb[0].mxu0
    %v962 = vadd.f32 %v847, %v961
    %v963 = vpop.f32.mrb[0].mxu0
    %v964 = vadd.f32 %v843, %v963
    %v965 = vpop.f32.mrb[0].mxu0
    %v966 = vadd.f32 %v847, %v965
    %967 = vmatprep.mubr.bf16.mxu0 0
    %968 = vmatmul.mubr.bf16.gmra.mrb[0].mxu0 %v898
    %v969 = vpop.f32.mrb[0].mxu0
    %v970 = vadd.f32 %v843, %v969
    %v971 = vpop.f32.mrb[0].mxu0
    %v972 = vadd.f32 %v847, %v971
    %v973 = vpop.f32.mrb[0].mxu0
    %v974 = vadd.f32 %v843, %v973
    %v975 = vpop.f32.mrb[0].mxu0
    %v976 = vadd.f32 %v847, %v975
    %977 = vmatprep.mubr.bf16.mxu0 0
    %978 = vmatmul.mubr.bf16.gmra.mrb[0].mxu0 %v901
    %v979 = vpop.f32.mrb[0].mxu0
    %v980 = vadd.f32 %v843, %v979
    %v981 = vpop.f32.mrb[0].mxu0
    %v982 = vadd.f32 %v847, %v981
    %v983 = vpop.f32.mrb[0].mxu0
    %v984 = vadd.f32 %v843, %v983
    %v985 = vpop.f32.mrb[0].mxu0
    %v986 = vadd.f32 %v847, %v985
    %987 = vmatprep.mubr.bf16.mxu0 0
    %988 = vmatmul.mubr.bf16.gmra.mrb[0].mxu0 %v904
    %v989 = vpop.f32.mrb[0].mxu0
    %v990 = vadd.f32 %v843, %v989
    %v991 = vpop.f32.mrb[0].mxu0
    %v992 = vadd.f32 %v847, %v991
    %v993 = vpop.f32.mrb[0].mxu0
    %v994 = vadd.f32 %v843, %v993
    %v995 = vpop.f32.mrb[0].mxu0
    %v996 = vadd.f32 %v847, %v995
    %997 = vmatprep.mubr.bf16.mxu0 0
    %998 = vmatmul.mubr.bf16.gmra.mrb[0].mxu0 %v907
    %v999 = vpop.f32.mrb[0].mxu0
    %v1000 = vadd.f32 %v843, %v999
    %v1001 = vpop.f32.mrb[0].mxu0
    %v1002 = vadd.f32 %v847, %v1001
    %v1003 = vpop.f32.mrb[0].mxu0
    %v1004 = vadd.f32 %v843, %v1003
    %v1005 = vpop.f32.mrb[0].mxu0
    %v1006 = vadd.f32 %v847, %v1005
    %1007 = vmatprep.mubr.bf16.mxu0 0
    %1008 = vmatmul.mubr.bf16.gmra.mrb[0].mxu0 %v910
    %v1009 = vpop.f32.mrb[0].mxu0
    %v1010 = vadd.f32 %v843, %v1009
    %v1011 = vpop.f32.mrb[0].mxu0
    %v1012 = vadd.f32 %v847, %v1011
    %v1013 = vpop.f32.mrb[0].mxu0
    %v1014 = vadd.f32 %v843, %v1013
    %v1015 = vpop.f32.mrb[0].mxu0
    %v1016 = vadd.f32 %v847, %v1015
    %1017 = vmatprep.mubr.bf16.mxu0 0
    %1018 = vmatmul.mubr.bf16.gmra.mrb[0].mxu0 %v913
    %v1019 = vpop.f32.mrb[0].mxu0
    %v1020 = vadd.f32 %v843, %v1019
    %v1021 = vpop.f32.mrb[0].mxu0
    %v1022 = vadd.f32 %v847, %v1021
    %v1023 = vpop.f32.mrb[0].mxu0
    %v1024 = vadd.f32 %v843, %v1023
    %v1025 = vpop.f32.mrb[0].mxu0
    %v1026 = vadd.f32 %v847, %v1025
    %1027 = vdwg.mxu0
    %v1028 = vmax.f32 %v950, 0.0
    %v1029 = vmax.f32 %v952, 0.0
    %v1030 = vmax.f32 %v954, 0.0
    %v1031 = vmax.f32 %v956, 0.0
    %v1032 = vmax.f32 %v960, 0.0
    %v1033 = vmax.f32 %v962, 0.0
    %v1034 = vmax.f32 %v964, 0.0
    %v1035 = vmax.f32 %v966, 0.0
    %v1036 = vmax.f32 %v970, 0.0
    %v1037 = vmax.f32 %v972, 0.0
    %v1038 = vmax.f32 %v974, 0.0
    %v1039 = vmax.f32 %v976, 0.0
    %v1040 = vmax.f32 %v980, 0.0
    %v1041 = vmax.f32 %v982, 0.0
    %v1042 = vmax.f32 %v984, 0.0
    %v1043 = vmax.f32 %v986, 0.0
    %v1044 = vmax.f32 %v990, 0.0
    %v1045 = vmax.f32 %v992, 0.0
    %v1046 = vmax.f32 %v994, 0.0
    %v1047 = vmax.f32 %v996, 0.0
    %v1048 = vmax.f32 %v1000, 0.0
    %v1049 = vmax.f32 %v1002, 0.0
    %v1050 = vmax.f32 %v1004, 0.0
    %v1051 = vmax.f32 %v1006, 0.0
    %v1052 = vmax.f32 %v1010, 0.0
    %v1053 = vmax.f32 %v1012, 0.0
    %v1054 = vmax.f32 %v1014, 0.0
    %v1055 = vmax.f32 %v1016, 0.0
    %v1056 = vmax.f32 %v1020, 0.0
    %v1057 = vmax.f32 %v1022, 0.0
    %v1058 = vmax.f32 %v1024, 0.0
    %v1059 = vmax.f32 %v1026, 0.0
    %v1060 = vpack.c.bf16 %v1030, %v1028
    %v1061 = vpack.c.bf16 %v1031, %v1029
    %v1062 = vpack.c.bf16 %v1034, %v1032
    %v1063 = vpack.c.bf16 %v1035, %v1033
    %v1064 = vpack.c.bf16 %v1038, %v1036
    %v1065 = vpack.c.bf16 %v1039, %v1037
    %v1066 = vpack.c.bf16 %v1042, %v1040
    %v1067 = vpack.c.bf16 %v1043, %v1041
    %v1068 = vpack.c.bf16 %v1046, %v1044
    %v1069 = vpack.c.bf16 %v1047, %v1045
    %v1070 = vpack.c.bf16 %v1050, %v1048
    %v1071 = vpack.c.bf16 %v1051, %v1049
    %v1072 = vpack.c.bf16 %v1054, %v1052
    %v1073 = vpack.c.bf16 %v1055, %v1053
    %v1074 = vpack.c.bf16 %v1058, %v1056
    %v1075 = vpack.c.bf16 %v1059, %v1057
    %v1076 = vld [vmem:[#allocation7] sm:$0xf]
    %v1077 = vld [vmem:[#allocation7 + $0x4] sm:$0xf]
    %v1078 = vld [vmem:[#allocation7 + $0x8] sm:$0xf]
    %v1079 = vld [vmem:[#allocation7 + $0xc] sm:$0xf]
    %v1080 = vld [vmem:[#allocation7 + $0x10] sm:$0xf]
    %v1081 = vld [vmem:[#allocation7 + $0x14] sm:$0xf]
    %v1082 = vld [vmem:[#allocation7 + $0x18] sm:$0xf]
    %v1083 = vld [vmem:[#allocation7 + $0x1c] sm:$0xf]
    %v1084 = vld [vmem:[#allocation7 + $0x20] sm:$0xf]
    %v1085 = vld [vmem:[#allocation7 + $0x24] sm:$0xf]
    %v1086 = vld [vmem:[#allocation7 + $0x28] sm:$0xf]
    %v1087 = vld [vmem:[#allocation7 + $0x2c] sm:$0xf]
    %v1088 = vld [vmem:[#allocation7 + $0x30] sm:$0xf]
    %v1089 = vld [vmem:[#allocation7 + $0x34] sm:$0xf]
    %v1090 = vld [vmem:[#allocation7 + $0x38] sm:$0xf]
    %v1091 = vld [vmem:[#allocation7 + $0x3c] sm:$0xf]
    %v1092 = vld [vmem:[#allocation7 + $0x40] sm:$0xf]
    %v1093 = vld [vmem:[#allocation7 + $0x44] sm:$0xf]
    %v1094 = vld [vmem:[#allocation7 + $0x48] sm:$0xf]
    %v1095 = vld [vmem:[#allocation7 + $0x4c] sm:$0xf]
    %v1096 = vld [vmem:[#allocation7 + $0x50] sm:$0xf]
    %v1097 = vld [vmem:[#allocation7 + $0x54] sm:$0xf]
    %v1098 = vld [vmem:[#allocation7 + $0x58] sm:$0xf]
    %v1099 = vld [vmem:[#allocation7 + $0x5c] sm:$0xf]
    %v1100 = vld [vmem:[#allocation7 + $0x60] sm:$0xf]
    %v1101 = vld [vmem:[#allocation7 + $0x64] sm:$0xf]
    %v1102 = vld [vmem:[#allocation7 + $0x68] sm:$0xf]
    %v1103 = vld [vmem:[#allocation7 + $0x6c] sm:$0xf]
    %v1104 = vld [vmem:[#allocation7 + $0x70] sm:$0xf]
    %v1105 = vld [vmem:[#allocation7 + $0x74] sm:$0xf]
    %v1106 = vld [vmem:[#allocation7 + $0x78] sm:$0xf]
    %v1107 = vld [vmem:[#allocation7 + $0x7c] sm:$0xf]
    %v1108 = vld [vmem:[%s9] sm:$0x1]
    %v1110 = vlaneseq
    %v1111 = vshrl.u32 %v1110, 7
    %v1112 = vsub.s32 0, %v1111
    %v1113 = vrot.slane %v1108, %v1112
    %v1147 = vunpack.c.l.b16 %v1076
    %v1148 = vunpack.c.l.b16 %v1077
    %v1149 = vunpack.c.l.b16 %v1078
    %v1150 = vunpack.c.l.b16 %v1079
    %v1151 = vunpack.c.l.b16 %v1080
    %v1152 = vunpack.c.l.b16 %v1081
    %v1153 = vunpack.c.l.b16 %v1082
    %v1154 = vunpack.c.l.b16 %v1083
    %v1155 = vunpack.c.l.b16 %v1084
    %v1156 = vunpack.c.l.b16 %v1085
    %v1157 = vunpack.c.l.b16 %v1086
    %v1158 = vunpack.c.l.b16 %v1087
    %v1159 = vunpack.c.l.b16 %v1088
    %v1160 = vunpack.c.l.b16 %v1089
    %v1161 = vunpack.c.l.b16 %v1090
    %v1162 = vunpack.c.l.b16 %v1091
    %v1163 = vunpack.c.l.b16 %v1092
    %v1164 = vunpack.c.l.b16 %v1093
    %v1165 = vunpack.c.l.b16 %v1094
    %v1166 = vunpack.c.l.b16 %v1095
    %v1167 = vunpack.c.l.b16 %v1096
    %v1168 = vunpack.c.l.b16 %v1097
    %v1169 = vunpack.c.l.b16 %v1098
    %v1170 = vunpack.c.l.b16 %v1099
    %v1171 = vunpack.c.l.b16 %v1100
    %v1172 = vunpack.c.l.b16 %v1101
    %v1173 = vunpack.c.l.b16 %v1102
    %v1174 = vunpack.c.l.b16 %v1103
    %v1175 = vunpack.c.l.b16 %v1104
    %v1176 = vunpack.c.l.b16 %v1105
    %v1177 = vunpack.c.l.b16 %v1106
    %v1178 = vunpack.c.l.b16 %v1107
    %v1179 = vpack.c.b16 %v1148, %v1147
    %v1180 = vpack.c.b16 %v1150, %v1149
    %v1181 = vpack.c.b16 %v1152, %v1151
    %v1182 = vpack.c.b16 %v1154, %v1153
    %v1183 = vpack.c.b16 %v1156, %v1155
    %v1184 = vpack.c.b16 %v1158, %v1157
    %v1185 = vpack.c.b16 %v1160, %v1159
    %v1186 = vpack.c.b16 %v1162, %v1161
    %v1187 = vpack.c.b16 %v1164, %v1163
    %v1188 = vpack.c.b16 %v1166, %v1165
    %v1189 = vpack.c.b16 %v1168, %v1167
    %v1190 = vpack.c.b16 %v1170, %v1169
    %v1191 = vpack.c.b16 %v1172, %v1171
    %v1192 = vpack.c.b16 %v1174, %v1173
    %v1193 = vpack.c.b16 %v1176, %v1175
    %v1194 = vpack.c.b16 %v1178, %v1177
    %1211 = vmatprep.subr.bf16.mxu0 0
    %1212 = vmatpush1.bf16.msra.mxu0 %v1179
    %1213 = vmatprep.subr.bf16.mxu0 0
    %1214 = vmatpush1.bf16.msra.mxu0 %v1180
    %1215 = vmatprep.subr.bf16.mxu0 0
    %1216 = vmatpush1.bf16.msra.mxu0 %v1181
    %1217 = vmatprep.subr.bf16.mxu0 0
    %1218 = vmatpush1.bf16.msra.mxu0 %v1182
    %1219 = vmatprep.subr.bf16.mxu0 0
    %1220 = vmatpush1.bf16.msra.mxu0 %v1183
    %1221 = vmatprep.subr.bf16.mxu0 0
    %1222 = vmatpush1.bf16.msra.mxu0 %v1184
    %1223 = vmatprep.subr.bf16.mxu0 0
    %1224 = vmatpush1.bf16.msra.mxu0 %v1185
    %1225 = vmatprep.subr.bf16.mxu0 0
    %1226 = vmatpush1.bf16.msra.mxu0 %v1186
    %1227 = vmatprep.subr.bf16.mxu0 0
    %1228 = vmatpush1.bf16.msra.mxu0 %v1187
    %1229 = vmatprep.subr.bf16.mxu0 0
    %1230 = vmatpush1.bf16.msra.mxu0 %v1188
    %1231 = vmatprep.subr.bf16.mxu0 0
    %1232 = vmatpush1.bf16.msra.mxu0 %v1189
    %1233 = vmatprep.subr.bf16.mxu0 0
    %1234 = vmatpush1.bf16.msra.mxu0 %v1190
    %1235 = vmatprep.subr.bf16.mxu0 0
    %1236 = vmatpush1.bf16.msra.mxu0 %v1191
    %1237 = vmatprep.subr.bf16.mxu0 0
    %1238 = vmatpush1.bf16.msra.mxu0 %v1192
    %1239 = vmatprep.subr.bf16.mxu0 0
    %1240 = vmatpush1.bf16.msra.mxu0 %v1193
    %1241 = vmatprep.subr.bf16.mxu0 0
    %1242 = vmatpush1.bf16.msra.mxu0 %v1194
    %1243 = vmatprep.mubr.bf16.mxu0 %v1061
    %1244 = vmatmul.mubr.bf16.gmra.mrb[0].mxu0 %v1060
    %v1245 = vpop.f32.mrb[0].mxu0
    %v1246 = vadd.f32 %v1113, %v1245
    %v1247 = vpop.f32.mrb[0].mxu0
    %v1248 = vpop.f32.mrb[0].mxu0
    %v1249 = vadd.f32 %v1113, %v1248
    %v1250 = vpop.f32.mrb[0].mxu0
    %1251 = vmatprep.mubr.bf16.mxu0 %v1063
    %1252 = vmatmul.mubr.bf16.gmra.mrb[0].mxu0 %v1062
    %v1253 = vpop.f32.mrb[0].mxu0
    %v1254 = vadd.f32 %v1113, %v1253
    %v1255 = vpop.f32.mrb[0].mxu0
    %v1256 = vpop.f32.mrb[0].mxu0
    %v1257 = vadd.f32 %v1113, %v1256
    %v1258 = vpop.f32.mrb[0].mxu0
    %1259 = vmatprep.mubr.bf16.mxu0 %v1065
    %1260 = vmatmul.mubr.bf16.gmra.mrb[0].mxu0 %v1064
    %v1261 = vpop.f32.mrb[0].mxu0
    %v1262 = vadd.f32 %v1113, %v1261
    %v1263 = vpop.f32.mrb[0].mxu0
    %v1264 = vpop.f32.mrb[0].mxu0
    %v1265 = vadd.f32 %v1113, %v1264
    %v1266 = vpop.f32.mrb[0].mxu0
    %1267 = vmatprep.mubr.bf16.mxu0 %v1067
    %1268 = vmatmul.mubr.bf16.gmra.mrb[0].mxu0 %v1066
    %v1269 = vpop.f32.mrb[0].mxu0
    %v1270 = vadd.f32 %v1113, %v1269
    %v1271 = vpop.f32.mrb[0].mxu0
    %v1272 = vpop.f32.mrb[0].mxu0
    %v1273 = vadd.f32 %v1113, %v1272
    %v1274 = vpop.f32.mrb[0].mxu0
    %1275 = vmatprep.mubr.bf16.mxu0 %v1069
    %1276 = vmatmul.mubr.bf16.gmra.mrb[0].mxu0 %v1068
    %v1277 = vpop.f32.mrb[0].mxu0
    %v1278 = vadd.f32 %v1113, %v1277
    %v1279 = vpop.f32.mrb[0].mxu0
    %v1280 = vpop.f32.mrb[0].mxu0
    %v1281 = vadd.f32 %v1113, %v1280
    %v1282 = vpop.f32.mrb[0].mxu0
    %1283 = vmatprep.mubr.bf16.mxu0 %v1071
    %1284 = vmatmul.mubr.bf16.gmra.mrb[0].mxu0 %v1070
    %v1285 = vpop.f32.mrb[0].mxu0
    %v1286 = vadd.f32 %v1113, %v1285
    %v1287 = vpop.f32.mrb[0].mxu0
    %v1288 = vpop.f32.mrb[0].mxu0
    %v1289 = vadd.f32 %v1113, %v1288
    %v1290 = vpop.f32.mrb[0].mxu0
    %1291 = vmatprep.mubr.bf16.mxu0 %v1073
    %1292 = vmatmul.mubr.bf16.gmra.mrb[0].mxu0 %v1072
    %v1293 = vpop.f32.mrb[0].mxu0
    %v1294 = vadd.f32 %v1113, %v1293
    %v1295 = vpop.f32.mrb[0].mxu0
    %v1296 = vpop.f32.mrb[0].mxu0
    %v1297 = vadd.f32 %v1113, %v1296
    %v1298 = vpop.f32.mrb[0].mxu0
    %1299 = vmatprep.mubr.bf16.mxu0 %v1075
    %1300 = vmatmul.mubr.bf16.gmra.mrb[0].mxu0 %v1074
    %v1301 = vpop.f32.mrb[0].mxu0
    %v1302 = vadd.f32 %v1113, %v1301
    %v1303 = vpop.f32.mrb[0].mxu0
    %v1304 = vpop.f32.mrb[0].mxu0
    %v1305 = vadd.f32 %v1113, %v1304
    %v1306 = vpop.f32.mrb[0].mxu0
    %1307 = vdwg.mxu0
    %v1308 = vsub.f32 0.0, %v1246
    %v1309 = vsub.f32 0.0, %v1249
    %v1310 = vsub.f32 0.0, %v1254
    %v1311 = vsub.f32 0.0, %v1257
    %v1312 = vsub.f32 0.0, %v1262
    %v1313 = vsub.f32 0.0, %v1265
    %v1314 = vsub.f32 0.0, %v1270
    %v1315 = vsub.f32 0.0, %v1273
    %v1316 = vsub.f32 0.0, %v1278
    %v1317 = vsub.f32 0.0, %v1281
    %v1318 = vsub.f32 0.0, %v1286
    %v1319 = vsub.f32 0.0, %v1289
    %v1320 = vsub.f32 0.0, %v1294
    %v1321 = vsub.f32 0.0, %v1297
    %v1322 = vsub.f32 0.0, %v1302
    %v1323 = vsub.f32 0.0, %v1305
    %v1324 = vmul.f32 %v1308, 1.442695
    %v1325 = vpow.pop %v1324
    %v1326 = vmul.f32 %v1309, 1.442695
    %v1327 = vpow.pop %v1326
    %v1328 = vmul.f32 %v1310, 1.442695
    %v1329 = vpow.pop %v1328
    %v1330 = vmul.f32 %v1311, 1.442695
    %v1331 = vpow.pop %v1330
    %v1332 = vmul.f32 %v1312, 1.442695
    %v1333 = vpow.pop %v1332
    %v1334 = vmul.f32 %v1313, 1.442695
    %v1335 = vpow.pop %v1334
    %v1336 = vmul.f32 %v1314, 1.442695
    %v1337 = vpow.pop %v1336
    %v1338 = vmul.f32 %v1315, 1.442695
    %v1339 = vpow.pop %v1338
    %v1340 = vmul.f32 %v1316, 1.442695
    %v1341 = vpow.pop %v1340
    %v1342 = vmul.f32 %v1317, 1.442695
    %v1343 = vpow.pop %v1342
    %v1344 = vmul.f32 %v1318, 1.442695
    %v1345 = vpow.pop %v1344
    %v1346 = vmul.f32 %v1319, 1.442695
    %v1347 = vpow.pop %v1346
    %v1348 = vmul.f32 %v1320, 1.442695
    %v1349 = vpow.pop %v1348
    %v1350 = vmul.f32 %v1321, 1.442695
    %v1351 = vpow.pop %v1350
    %v1352 = vmul.f32 %v1322, 1.442695
    %v1353 = vpow.pop %v1352
    %v1354 = vmul.f32 %v1323, 1.442695
    %v1355 = vpow.pop %v1354
    %v1356 = vadd.f32 %v1325, 1.0
    %v1357 = vadd.f32 %v1327, 1.0
    %v1358 = vadd.f32 %v1329, 1.0
    %v1359 = vadd.f32 %v1331, 1.0
    %v1360 = vadd.f32 %v1333, 1.0
    %v1361 = vadd.f32 %v1335, 1.0
    %v1362 = vadd.f32 %v1337, 1.0
    %v1363 = vadd.f32 %v1339, 1.0
    %v1364 = vadd.f32 %v1341, 1.0
    %v1365 = vadd.f32 %v1343, 1.0
    %v1366 = vadd.f32 %v1345, 1.0
    %v1367 = vadd.f32 %v1347, 1.0
    %v1368 = vadd.f32 %v1349, 1.0
    %v1369 = vadd.f32 %v1351, 1.0
    %v1370 = vadd.f32 %v1353, 1.0
    %v1371 = vadd.f32 %v1355, 1.0
    %v1372 = vrcp.pop %v1356
    %v1373 = vrcp.pop %v1357
    %v1374 = vrcp.pop %v1358
    %v1375 = vrcp.pop %v1359
    %v1376 = vrcp.pop %v1360
    %v1377 = vrcp.pop %v1361
    %v1378 = vrcp.pop %v1362
    %v1379 = vrcp.pop %v1363
    %v1380 = vrcp.pop %v1364
    %v1381 = vrcp.pop %v1365
    %v1382 = vrcp.pop %v1366
    %v1383 = vrcp.pop %v1367
    %v1384 = vrcp.pop %v1368
    %v1385 = vrcp.pop %v1369
    %v1386 = vrcp.pop %v1370
    %v1387 = vrcp.pop %v1371
    %1388 = vst [vmem:[#allocation8] sm:$0xff] %v1372
    %1389 = vst [vmem:[#allocation8 + $0x8] sm:$0xff] %v1373
    %1390 = vst [vmem:[#allocation8 + $0x10] sm:$0xff] %v1374
    %1391 = vst [vmem:[#allocation8 + $0x18] sm:$0xff] %v1375
    %1392 = vst [vmem:[#allocation8 + $0x20] sm:$0xff] %v1376
    %1393 = vst [vmem:[#allocation8 + $0x28] sm:$0xff] %v1377
    %1394 = vst [vmem:[#allocation8 + $0x30] sm:$0xff] %v1378
    %1395 = vst [vmem:[#allocation8 + $0x38] sm:$0xff] %v1379
    %1396 = vst [vmem:[#allocation8 + $0x40] sm:$0xff] %v1380
    %1397 = vst [vmem:[#allocation8 + $0x48] sm:$0xff] %v1381
    %1398 = vst [vmem:[#allocation8 + $0x50] sm:$0xff] %v1382
    %1399 = vst [vmem:[#allocation8 + $0x58] sm:$0xff] %v1383
    %1400 = vst [vmem:[#allocation8 + $0x60] sm:$0xff] %v1384
    %1401 = vst [vmem:[#allocation8 + $0x68] sm:$0xff] %v1385
    %1402 = vst [vmem:[#allocation8 + $0x70] sm:$0xff] %v1386
    %1403 = vst [vmem:[#allocation8 + $0x78] sm:$0xff] %v1387
    // Predicated region
    $region54: #{tpu_custom_call.1} parent=1 // pred_check
      _
    $region55: #{tpu_custom_call.1} parent=1 // pred_check_branch
      %1405 = sbr.rel (0) target = $region57
    $region56: #{tpu_custom_call.1} parent=1 // pred_region
      %s1407 = ssub.s32 2048, 2048
      %1408 = vsyncadd [#allocation4], %s1407
      %s1409 = sshll.u32 [#allocation8], 4
      %s1410 = int_to_ptr.vmem [resolvable:$true] %s1409
      %1415 = dma.vmem_to_hbm [thread:$0]  %s1410, 2048, %s10, [#allocation4], 128, 128, 8
    $region57: #{tpu_custom_call.1} parent=1 // pred_fallthru
      _
    // Predicated region
    $region58: #{tpu_custom_call.1} parent=1 // pred_check
      _
    $region59: #{tpu_custom_call.1} parent=1 // pred_check_branch
      %1417 = sbr.rel (0) target = $region61
    $region60: #{tpu_custom_call.1} parent=1 // pred_region
      %s1419 = ssub.s32 2048, 2048
      %1420 = vsyncadd [#allocation10], %s1419
      %s1421 = sshll.u32 [#allocation9], 4
      %s1422 = int_to_ptr.vmem [resolvable:$true] %s1421
      %1427 = dma.vmem_to_hbm [thread:$0]  %s1422, 2048, %s11, [#allocation10], 128, 128, 8
    $region61: #{tpu_custom_call.1} parent=1 // pred_fallthru
      _
    // Predicated region
    $region62: #{tpu_custom_call.1} parent=1 // pred_check
      _
    $region63: #{tpu_custom_call.1} parent=1 // pred_check_branch
      %1429 = sbr.rel (0) target = $region65
    $region64: #{tpu_custom_call.1} parent=1 // pred_region
      %1430 = dma.done [#allocation4], 2048
    $region65: #{tpu_custom_call.1} parent=1 // pred_fallthru
      _
    // Predicated region
    $region66: #{tpu_custom_call.1} parent=1 // pred_check
      _
    $region67: #{tpu_custom_call.1} parent=1 // pred_check_branch
      %1432 = sbr.rel (0) target = $region69
    $region68: #{tpu_custom_call.1} parent=1 // pred_region
      %1433 = dma.done [#allocation10], 2048
    $region69: #{tpu_custom_call.1} parent=1 // pred_fallthru
      _
    %1434 = vsyncpa [#allocation3], 1
    %1435 = vsyncpa [#allocation6], 1
    %1436 = vsyncpa [#allocation4], 1
    %1437 = vsyncpa [#allocation10], 1

</llo_original>
